<compile_context>
chip_gen: v7x
topology: tpu7x:2x2x1
jax: 0.10.0
libtpu: 0.0.40
codegen_flags: <defaults>
</compile_context>

<pallas_src>
import jax
import jax.numpy as jnp
from jax.experimental import pallas as pl
from jax.experimental.pallas import tpu as pltpu


def _zero_conv_kernel(x_ref, wt_ref, b_ref, o_ref):
    # x_ref : (b_blk, Cin, T)   channels-first tile, spatial on the lane axis
    # wt_ref: (Cout, Cin)       precomposed weight (left-multiply orientation)
    # b_ref : (Cout, 1)         precomposed bias column (lane-broadcast)
    # o_ref : (b_blk, Cout, T)
    w = wt_ref[...]
    bias = b_ref[...]
    for i in range(x_ref.shape[0]):          # static unroll over batch sub-block
        h = jnp.dot(w, x_ref[i], preferred_element_type=jnp.float32)
        o_ref[i] = (h + bias).astype(o_ref.dtype)


def _largest_divisor_le(n, cap):
    cap = max(1, min(n, cap))
    for d in range(cap, 0, -1):
        if n % d == 0:
            return d
    return 1


def _choose_tiling(B, Cin, HW, itemsize, tile_hw,
                   target_bytes=2 << 20, max_batch_unroll=32):
    """Pick (b_blk, t_hw): each grid step should move ~target_bytes of input,
    and the grid should have >= 2 steps whenever there is enough work so both
    v7x TensorCores are used.  b_blk always divides B; spatial may be ragged."""
    lane = 128
    tile_hw = max(lane, (tile_hw // lane) * lane)
    if HW > tile_hw:
        # Spatial tiling, one batch element per step (~1.7 MiB/step at 32K lanes).
        return 1, tile_hw
    # HW fits in a single full-extent block: amortize over the batch instead.
    per_batch = Cin * HW * itemsize
    want = max(1, target_bytes // max(per_batch, 1))
    b_blk = min(B, want, max_batch_unroll)
    if B >= 2:
        b_blk = min(b_blk, -(-B // 2))        # keep >= 2 grid steps
        return _largest_divisor_le(B, b_blk), HW
    # B == 1: split the spatial axis so both TensorCores still get work.
    if HW >= 2 * lane:
        half = -(-HW // 2)
        return 1, -(-half // lane) * lane     # ragged last tile is fine
    return 1, HW


def zero_conv_net_forward(noisy_latents, timesteps, encoder_hidden_states,
                          params, *, tile_hw=32768):
    """noisy_latents: NCHW float32 [B, 13, H, W]  ->  NCHW [B, 4, H, W]."""
    del timesteps, encoder_hidden_states  # consumed by the (identity) unet stub
    B, Cin, H, W = noisy_latents.shape
    (w1, b1), (w2, b2), (w3, b3), (w4, b4) = params
    Cout = w4.shape[1]

    # Precompose the purely linear 1x1-conv chain (exact for a linear chain).
    w = w1 @ w2 @ w3 @ w4                              # (Cin, Cout)
    b = ((b1 @ w2 + b2) @ w3 + b3) @ w4 + b4           # (1, Cout)
    wt = jnp.transpose(w)                              # (Cout, Cin)
    bc = jnp.transpose(b)                              # (Cout, 1)

    # Channels-first view of NCHW: a free reshape, no transposes, no padding.
    HW = H * W
    x = noisy_latents.reshape(B, Cin, HW)

    itemsize = jnp.dtype(noisy_latents.dtype).itemsize
    b_blk, t_hw = _choose_tiling(B, Cin, HW, itemsize, tile_hw)
    grid = (pl.cdiv(B, b_blk), pl.cdiv(HW, t_hw))      # ragged last spatial tile OK

    out = pl.pallas_call(
        _zero_conv_kernel,
        out_shape=jax.ShapeDtypeStruct((B, Cout, HW), noisy_latents.dtype),
        grid_spec=pltpu.PrefetchScalarGridSpec(
            num_scalar_prefetch=0,
            grid=grid,
            in_specs=[
                pl.BlockSpec((b_blk, Cin, t_hw), lambda i, j: (i, 0, j)),  # x tile
                pl.BlockSpec((Cout, Cin), lambda i, j: (0, 0)),            # weight
                pl.BlockSpec((Cout, 1), lambda i, j: (0, 0)),              # bias
            ],
            out_specs=pl.BlockSpec((b_blk, Cout, t_hw), lambda i, j: (i, 0, j)),
        ),
        compiler_params=pltpu.CompilerParams(
            dimension_semantics=("parallel", "parallel")),
    )(x, wt, bc)

    conv_out = out.reshape(B, Cout, H, W)

    # TODO(synk): unet stub (identity) — real unet architecture is external.
    return conv_out


def init_params(key, in_channels=13, out_channels=4, dtype=jnp.float32):
    """Uniform-scaling init matching _uniform_initialize_weights.

    PyTorch Conv2d weight shape is (cout, cin, 1, 1); we store the matmul form
    (cin, cout) and biases as (1, cout) rows (zero-initialized).
    """
    dims = [in_channels, 12, 8, 6, out_channels]
    params = []
    for i in range(4):
        cin, cout = dims[i], dims[i + 1]
        key, sub = jax.random.split(key)
        scale = 1.0 / (cin ** 0.5)
        w = jax.random.uniform(sub, (cin, cout), dtype=dtype,
                               minval=-scale, maxval=scale)
        b = jnp.zeros((1, cout), dtype=dtype)
        params.append((w, b))
    return params


def _reference_forward(noisy_latents, params):
    """Plain-JAX reference: chain of 1x1 convs as per-pixel matmuls."""
    B, Cin, H, W = noisy_latents.shape
    x = jnp.transpose(noisy_latents, (0, 2, 3, 1)).reshape(-1, Cin)
    for w, b in params:
        x = x @ w + b
    Cout = params[-1][0].shape[1]
    return jnp.transpose(x.reshape(B, H, W, Cout), (0, 3, 1, 2))


if __name__ == "__main__":
    key = jax.random.PRNGKey(0)
    k_x, k_t, k_h, k_p = jax.random.split(key, 4)

    B, Cin, H, W = 2, 13, 16, 16
    noisy_latents = jax.random.normal(k_x, (B, Cin, H, W), dtype=jnp.float32)
    timesteps = jax.random.randint(k_t, (B,), 0, 1000)
    encoder_hidden_states = jax.random.normal(k_h, (B, 8, 32), dtype=jnp.float32)

    params = init_params(k_p, in_channels=Cin, out_channels=4)

    out = zero_conv_net_forward(noisy_latents, timesteps,
                                encoder_hidden_states, params)
    out = jax.block_until_ready(out)

    ref = _reference_forward(noisy_latents, params)
    assert out.shape == (B, 4, H, W), out.shape
    assert jnp.allclose(out, ref, atol=1e-5, rtol=1e-5), \
        float(jnp.max(jnp.abs(out - ref)))

    # Ragged spatial tiling (HW % tile != 0): exercises the masked-OOB last
    # block that replaced the old jnp.pad + output-slice path.
    H2, W2 = 20, 20
    x2 = jax.random.normal(k_x, (B, Cin, H2, W2), dtype=jnp.float32)
    out2 = zero_conv_net_forward(x2, timesteps, encoder_hidden_states,
                                 params, tile_hw=256)
    out2 = jax.block_until_ready(out2)
    ref2 = _reference_forward(x2, params)
    assert out2.shape == (B, 4, H2, W2), out2.shape
    assert jnp.allclose(out2, ref2, atol=1e-5, rtol=1e-5), \
        float(jnp.max(jnp.abs(out2 - ref2)))

    print("KERNEL_OK")
</pallas_src>

<mosaic_0001>
module attributes {stable_mosaic.version = 11 : i64} {
  func.func @_zero_conv_kernel(%arg0: i32, %arg1: i32, %arg2: memref<1x13x256xf32, #tpu.memory_space<vmem>>, %arg3: memref<4x13xf32, #tpu.memory_space<vmem>>, %arg4: memref<4x1xf32, #tpu.memory_space<vmem>>, %arg5: memref<1x4x256xf32, #tpu.memory_space<vmem>>) attributes {dimension_semantics = [#tpu.dimension_semantics<parallel>, #tpu.dimension_semantics<parallel>], iteration_bounds = array<i64: 2, 1>, scalar_prefetch = 0 : i64, scratch_operands = 0 : i64, tpu.core_type = #tpu.core_type<tc>, window_params = [{transform_indices = @transform_0, window_bounds = array<i64: 1, 13, 256>}, {pipeline_mode = #tpu.pipeline_mode<synchronous>, transform_indices = @transform_1, window_bounds = array<i64: 4, 13>}, {pipeline_mode = #tpu.pipeline_mode<synchronous>, transform_indices = @transform_2, window_bounds = array<i64: 4, 1>}, {transform_indices = @transform_3, window_bounds = array<i64: 1, 4, 256>}]} {
    %c0 = arith.constant 0 : index
    %c0_0 = arith.constant 0 : index
    %0 = vector.load %arg3[%c0, %c0_0] : memref<4x13xf32, #tpu.memory_space<vmem>>, vector<4x13xf32>
    %c0_1 = arith.constant 0 : index
    %c0_2 = arith.constant 0 : index
    %1 = vector.load %arg4[%c0_1, %c0_2] : memref<4x1xf32, #tpu.memory_space<vmem>>, vector<4x1xf32>
    %c0_3 = arith.constant 0 : index
    %c0_4 = arith.constant 0 : index
    %c0_5 = arith.constant 0 : index
    %2 = vector.load %arg2[%c0_3, %c0_4, %c0_5] : memref<1x13x256xf32, #tpu.memory_space<vmem>>, vector<1x13x256xf32>
    %3 = vector.shape_cast %2 : vector<1x13x256xf32> to vector<13x256xf32>
    %cst = arith.constant dense<0.000000e+00> : vector<4x256xf32>
    %4 = tpu.matmul %0, %3, %cst {dimension_numbers = #tpu.dot_dimension_numbers<[1], [0], [0], [1], [0, 0, 1, 1], [], []>} : vector<4x13xf32>, vector<13x256xf32>, vector<4x256xf32> -> vector<4x256xf32>
    %5 = vector.broadcast %1 : vector<4x1xf32> to vector<4x256xf32>
    %6 = arith.addf %4, %5 : vector<4x256xf32>
    %c0_6 = arith.constant 0 : index
    %c0_7 = arith.constant 0 : index
    %c0_8 = arith.constant 0 : index
    %7 = vector.load %arg5[%c0_6, %c0_7, %c0_8] : memref<1x4x256xf32, #tpu.memory_space<vmem>>, vector<1x4x256xf32>
    %8 = vector.shape_cast %7 : vector<1x4x256xf32> to vector<4x256xf32>
    %9 = vector.shape_cast %6 : vector<4x256xf32> to vector<1x4x256xf32>
    tpu.vector_store %arg5[%c0_6, %c0_7, %c0_8], %9 {strides = array<i32>} : memref<1x4x256xf32, #tpu.memory_space<vmem>>, vector<1x4x256xf32>,
    return
  }
  func.func @transform_0(%arg0: i32, %arg1: i32) -> (i32, i32, i32) {
    %c0_i32 = arith.constant 0 : i32
    %c0_i32_0 = arith.constant 0 : i32
    return %arg0, %c0_i32, %arg1 : i32, i32, i32
  }
  func.func @transform_1(%arg0: i32, %arg1: i32) -> (i32, i32) {
    %c0_i32 = arith.constant 0 : i32
    %c0_i32_0 = arith.constant 0 : i32
    %c0_i32_1 = arith.constant 0 : i32
    return %c0_i32, %c0_i32_0 : i32, i32
  }
  func.func @transform_2(%arg0: i32, %arg1: i32) -> (i32, i32) {
    %c0_i32 = arith.constant 0 : i32
    %c0_i32_0 = arith.constant 0 : i32
    %c0_i32_1 = arith.constant 0 : i32
    return %c0_i32, %c0_i32_0 : i32, i32
  }
  func.func @transform_3(%arg0: i32, %arg1: i32) -> (i32, i32, i32) {
    %c0_i32 = arith.constant 0 : i32
    %c0_i32_0 = arith.constant 0 : i32
    return %arg0, %c0_i32, %arg1 : i32, i32, i32
  }
}

</mosaic_0001>

<llo_original>
// kernel: tpu_custom_call.1
$region0: #{tpu_custom_call.1}
  #allocation0 [shape = 'u32[]', space=smem, size = 0x4, offset = 0x4, fixed_abs, tag = 'smem constant byte address 0x4 - core index']
  #allocation1 [shape = 'u32[144,128]{1,0:T(1,128)}', space=vmem, size = 0x12000, scoped, tag = 'internal scratch']
  %s0 = inlined_call_operand.vmem [shape: f32[2,13,256], index: 0, kind: input, shape index: {}]
  %s1 = inlined_call_operand.vmem [shape: f32[4,13], index: 1, kind: input, shape index: {}]
  %s2 = inlined_call_operand.vmem [shape: f32[4,1], index: 2, kind: input, shape index: {}]
  %s3 = inlined_call_operand.hbm [shape: f32[2,4,256], index: 3, kind: output, shape index: {}]
  %s4 = sld [smem:[#allocation0]]
  $region45: #{tpu_custom_call.1} parent=0
    _
  %s6 = ssub.s32 1, %s4
  %s7 = scalar_select 0, %s6, %s4
  $region1: #{tpu_custom_call.1} parent=0
    #allocation2 [shape = 'u8[8192]{0}', space=vmem, size = 0x2000, scoped, tag = 'output window, operand 0']
    #allocation3 [shape = 's32[2]{0}', space=sflag, size = 0x8, scoped, tag = 'scoped memory for tpu_custom_call.1']
    %8 = vsyncpa [#allocation3], 0
    %s9 = scalar_lea.sflag [#allocation3], 1
    %10 = vsyncpa %s9, 0
    loop: start=0, step=1, limit=4
    $region2: #{tpu_custom_call.1} parent=1 // loop_pre_header
      _
    $region3: #{tpu_custom_call.1} parent=1 // loop_header
      %s12 = sphi 0, %s16
      %p13 = scmp.ge.s32.totalorder %s12, 4
      %s19 = sphi 0, %s31
      %s20 = sphi 0, %s27
      %s21 = sphi 0, %s19
      %s22 = sphi 0, %s20
      %s23 = sphi 0, %s21
      %s24 = sphi 0, %s22
      %s36 = sphi 0, %s38
      %s39 = sphi 0, %s36
      %s40 = sphi 0, %s39
      %s56 = sphi 0, %s40
      %s60 = sphi 0, %s60
      %s62 = sphi 0, %s60
      %s63 = sphi 0, %s62
      %s77 = sphi 0, %s63
      %s81 = sphi 0, %s81
      %s83 = sphi 0, %s81
      %s84 = sphi 0, %s83
      %s98 = sphi 0, %s84
      %s106 = sphi 0, %s108
      %s109 = sphi 0, %s106
      %s110 = sphi 0, %s109
      %s126 = sphi 0, %s110
    $region4: #{tpu_custom_call.1} parent=1 // loop_header_branch
      %15 = sbr.rel (%p13) target = $region8
    $region5: #{tpu_custom_call.1} parent=1 // loop_body
      %s17 = ssub.s32 %s12, 1
      %s18 = ssub.s32 %s12, 2
      %s25 = sadd.s32 1, %s20
      %p26 = scmp.ge.s32.totalorder %s25, 1
      %s27 = scalar_select %p26, 0, %s25
      %s28 = sadd.s32 1, %s19
      %s29 = scalar_select %p26, %s28, %s19
      %p30 = scmp.ge.s32.totalorder %s29, 2
      %s31 = scalar_select %p30, 0, %s29
      %s32 = ssub.s32 %s19, %s31
      %s33 = ssub.s32 %s20, %s27
      %s34 = sor.u32 %s32, %s33
      %p35 = scmp.eq.s32.totalorder %s34, 0
      %s37 = sadd.s32 %s36, 1
      %s38 = scalar_select %p35, %s36, %s37
      %p41 = pneg %p35
      %p42 = scmp.eq.s32.totalorder %s12, 1
      %p43 = por %p41, %p42
      %p44 = scmp.ne.s32.totalorder %s36, %s39
      %p45 = scmp.eq.s32.totalorder %s12, 0
      %p46 = por %p44, %p45
      %p47 = scmp.ne.s32.totalorder %s36, %s39
      %p48 = scmp.eq.s32.totalorder %s17, 1
      %p49 = por %p47, %p48
      %p50 = scmp.ne.s32.totalorder %s39, %s40
      %p51 = scmp.eq.s32.totalorder %s17, 0
      %p52 = por %p50, %p51
      %p53 = scmp.ne.s32.totalorder %s39, %s40
      %p54 = scmp.eq.s32.totalorder %s18, 1
      %p55 = por %p53, %p54
      %p57 = scmp.ne.s32.totalorder %s40, %s56
      %p58 = scmp.eq.s32.totalorder %s18, 0
      %p59 = por %p57, %p58
      %s61 = sadd.s32 %s60, 1
      %p64 = scmp.eq.s32.totalorder %s12, 1
      %p65 = scmp.ne.s32.totalorder %s60, %s62
      %p66 = scmp.eq.s32.totalorder %s12, 0
      %p67 = por %p65, %p66
      %p68 = scmp.ne.s32.totalorder %s60, %s62
      %p69 = scmp.eq.s32.totalorder %s17, 1
      %p70 = por %p68, %p69
      %p71 = scmp.ne.s32.totalorder %s62, %s63
      %p72 = scmp.eq.s32.totalorder %s17, 0
      %p73 = por %p71, %p72
      %p74 = scmp.ne.s32.totalorder %s62, %s63
      %p75 = scmp.eq.s32.totalorder %s18, 1
      %p76 = por %p74, %p75
      %p78 = scmp.ne.s32.totalorder %s63, %s77
      %p79 = scmp.eq.s32.totalorder %s18, 0
      %p80 = por %p78, %p79
      %s82 = sadd.s32 %s81, 1
      %p85 = scmp.eq.s32.totalorder %s12, 1
      %p86 = scmp.ne.s32.totalorder %s81, %s83
      %p87 = scmp.eq.s32.totalorder %s12, 0
      %p88 = por %p86, %p87
      %p89 = scmp.ne.s32.totalorder %s81, %s83
      %p90 = scmp.eq.s32.totalorder %s17, 1
      %p91 = por %p89, %p90
      %p92 = scmp.ne.s32.totalorder %s83, %s84
      %p93 = scmp.eq.s32.totalorder %s17, 0
      %p94 = por %p92, %p93
      %p95 = scmp.ne.s32.totalorder %s83, %s84
      %p96 = scmp.eq.s32.totalorder %s18, 1
      %p97 = por %p95, %p96
      %p99 = scmp.ne.s32.totalorder %s84, %s98
      %p100 = scmp.eq.s32.totalorder %s18, 0
      %p101 = por %p99, %p100
      %s102 = ssub.s32 %s19, %s31
      %s103 = ssub.s32 %s20, %s27
      %s104 = sor.u32 %s102, %s103
      %p105 = scmp.eq.s32.totalorder %s104, 0
      %s107 = sadd.s32 %s106, 1
      %s108 = scalar_select %p105, %s106, %s107
      %p111 = pneg %p105
      %p112 = scmp.eq.s32.totalorder %s12, 1
      %p113 = por %p111, %p112
      %p114 = scmp.ne.s32.totalorder %s106, %s109
      %p115 = scmp.eq.s32.totalorder %s12, 0
      %p116 = por %p114, %p115
      %p117 = scmp.ne.s32.totalorder %s106, %s109
      %p118 = scmp.eq.s32.totalorder %s17, 1
      %p119 = por %p117, %p118
      %p120 = scmp.ne.s32.totalorder %s109, %s110
      %p121 = scmp.eq.s32.totalorder %s17, 0
      %p122 = por %p120, %p121
      %p123 = scmp.ne.s32.totalorder %s109, %s110
      %p124 = scmp.eq.s32.totalorder %s18, 1
      %p125 = por %p123, %p124
      %p127 = scmp.ne.s32.totalorder %s110, %s126
      %p128 = scmp.eq.s32.totalorder %s18, 0
      %p129 = por %p127, %p128
      %p130 = scmp.le.s32.totalorder 1, %s12
      %p131 = scmp.lt.s32.totalorder %s12, 3
      %p132 = pnand %p130, %p131
      %p133 = pneg %p132
      // Predicated region
      $region9: #{tpu_custom_call.1} parent=5 // pred_check
        _
      $region10: #{tpu_custom_call.1} parent=5 // pred_check_branch
        %135 = sbr.rel (%p132) target = $region12
      $region11: #{tpu_custom_call.1} parent=5 // pred_region
        %s136 = ssub.s32 %s12, 1
        // Predicated region
        $region13: #{tpu_custom_call.1} parent=11 // pred_check
          %p137 = pneg %p73
        $region14: #{tpu_custom_call.1} parent=11 // pred_check_branch
          %139 = sbr.rel (%p137) target = $region16
        $region15: #{tpu_custom_call.1} parent=11 // pred_region
          _
        $region16: #{tpu_custom_call.1} parent=11 // pred_fallthru
          _
        // Predicated region
        $region17: #{tpu_custom_call.1} parent=11 // pred_check
          %p140 = pneg %p94
        $region18: #{tpu_custom_call.1} parent=11 // pred_check_branch
          %142 = sbr.rel (%p140) target = $region20
        $region19: #{tpu_custom_call.1} parent=11 // pred_region
          _
        $region20: #{tpu_custom_call.1} parent=11 // pred_fallthru
          _
      $region12: #{tpu_custom_call.1} parent=5 // pred_fallthru
        _
      %p143 = scmp.lt.s32.totalorder %s12, 2
      // Predicated region
      $region21: #{tpu_custom_call.1} parent=5 // pred_check
        %p144 = pneg %p143
      $region22: #{tpu_custom_call.1} parent=5 // pred_check_branch
        %146 = sbr.rel (%p144) target = $region24
      $region23: #{tpu_custom_call.1} parent=5 // pred_region
        // Predicated region
        $region25: #{tpu_custom_call.1} parent=23 // pred_check
          %p147 = pneg %p46
        $region26: #{tpu_custom_call.1} parent=23 // pred_check_branch
          %149 = sbr.rel (%p147) target = $region28
        $region27: #{tpu_custom_call.1} parent=23 // pred_region
          %s150 = smul.u32 2, %s20
          %p151 = scmp.lt.s32.totalorder %s19, 1
          %s152 = scalar_select %p151, %s19, 1
          %p153 = scmp.lt.s32.totalorder %s150, 1
          %s154 = scalar_select %p153, %s150, 1
          %s155 = smul.addr %s152, 4
          %s156 = sadd.s32 %s154, %s155
          %s157 = smul.addr %s156, 8
          %s158 = scalar_lea.vmem %s0, %s157
          %s159 = smul.u32 2, %s20
        $region28: #{tpu_custom_call.1} parent=23 // pred_fallthru
          _
      $region24: #{tpu_custom_call.1} parent=5 // pred_fallthru
        _
      %p160 = scmp.le.s32.totalorder 1, %s12
      %p161 = scmp.lt.s32.totalorder %s12, 3
      %p162 = pnand %p160, %p161
      %p163 = pneg %p162
      // Predicated region
      $region29: #{tpu_custom_call.1} parent=5 // pred_check
        _
      $region30: #{tpu_custom_call.1} parent=5 // pred_check_branch
        %165 = sbr.rel (%p162) target = $region32
      $region31: #{tpu_custom_call.1} parent=5 // pred_region
        %s166 = ssub.s32 %s12, 1
        %s167 = smul.u32 2, %s22
        %p168 = scmp.lt.s32.totalorder %s21, 1
        %s169 = scalar_select %p168, %s21, 1
        %p170 = scmp.lt.s32.totalorder %s167, 1
        %s171 = scalar_select %p170, %s167, 1
        %s172 = smul.addr %s169, 4
        %s173 = sadd.s32 %s171, %s172
        %s174 = smul.addr %s173, 8
        %s175 = scalar_lea.vmem %s0, %s174
        %p176 = pneg %p52
        %p177 = pneg %p49
        %p178 = pneg %p73
        %p179 = pneg %p70
        %p180 = pneg %p94
        %p181 = pneg %p91
        %p182 = pneg %p122
        %p183 = pneg %p119
        %s184 = sand.u32 %s109, 1
        %s185 = scalar_lea.sflag [#allocation3], %s184
        %s186 = sand.u32 %s109, 1
        %s187 = smul.addr %s186, 8
        %s188 = scalar_lea.vmem [#allocation2], %s187
        %s189 = smul.u32 2, %s22
        %p190 = scmp.lt.s32.totalorder %s21, 1
        %s191 = scalar_select %p190, %s21, 1
        %p192 = scmp.lt.s32.totalorder %s189, 1
        %s193 = scalar_select %p192, %s189, 1
        %s194 = smul.addr %s191, 4
        %s195 = sadd.s32 %s193, %s194
        %s196 = smul.addr %s195, 8
        %s197 = scalar_lea.vmem %s0, %s196
        %s198 = smul.u32 2, %s22
        %s199 = smul.u32 2, %s22
        %v200 = vld [vmem:[%s1] sm:$0xf]
        %v201 = vld [vmem:[%s2] sm:$0xf]
        %v202 = vld [vmem:[%s197] sm:$0xff]
        %v203 = vld [vmem:[%s197 + $0x8] sm:$0xff]
        %v204 = vld [vmem:[%s197 + $0x10] sm:$0x1f]
        %v205 = vld [vmem:[%s197 + $0x18] sm:$0x1f]
        %207 = vset.pattern.permute.xlu0 0
        %208 = vperm.xlu0 %207, %v201
        %v209 = vpop.permute.xlu0 %208
        %vm211 = vcmask 105472
        %v213 = vsel %vm211, %v200, 0
        %vm215 = vcmask 1044480
        %v217 = vsel %vm215, %v204, 0
        %v220 = vsel %vm215, %v205, 0
        %222 = vmatprep.subr.mxu0 %v203
        %223 = vmatpush1.msra.mxu0 %v202
        %224 = vmatprep.subr.mxu0 %v220
        %225 = vmatpush1.msra.mxu0 %v217
        %226 = vmatprep.subr.mxu0 0.0
        %227 = vmatpush1.msra.mxu0 0.0
        %228 = vmatprep.subr.mxu0 0.0
        %229 = vmatpush1.msra.mxu0 0.0
        %230 = vmatprep.subr.mxu0 0.0
        %231 = vmatpush1.msra.mxu0 0.0
        %232 = vmatprep.subr.mxu0 0.0
        %233 = vmatpush1.msra.mxu0 0.0
        %234 = vmatprep.subr.mxu0 0.0
        %235 = vmatpush1.msra.mxu0 0.0
        %236 = vmatprep.subr.mxu0 0.0
        %237 = vmatpush1.msra.mxu0 0.0
        %238 = vmatprep.subr.mxu0 0.0
        %239 = vmatpush1.msra.mxu0 0.0
        %240 = vmatprep.subr.mxu0 0.0
        %241 = vmatpush1.msra.mxu0 0.0
        %242 = vmatprep.subr.mxu0 0.0
        %243 = vmatpush1.msra.mxu0 0.0
        %244 = vmatprep.subr.mxu0 0.0
        %245 = vmatpush1.msra.mxu0 0.0
        %246 = vmatprep.subr.mxu0 0.0
        %247 = vmatpush1.msra.mxu0 0.0
        %248 = vmatprep.subr.mxu0 0.0
        %249 = vmatpush1.msra.mxu0 0.0
        %250 = vmatprep.subr.mxu0 0.0
        %251 = vmatpush1.msra.mxu0 0.0
        %252 = vmatprep.subr.mxu0 0.0
        %253 = vmatpush1.msra.mxu0 0.0
        %254 = vmatprep.subr.mxu0 0.0
        %255 = vmatpush1.msra.mxu0 0.0
        %256 = vmatprep.subr.mxu0 0.0
        %257 = vmatpush1.msra.mxu0 0.0
        %258 = vmatprep.subr.mxu0 0.0
        %259 = vmatpush1.msra.mxu0 0.0
        %260 = vmatprep.subr.mxu0 0.0
        %261 = vmatpush1.msra.mxu0 0.0
        %262 = vmatprep.subr.mxu0 0.0
        %263 = vmatpush1.msra.mxu0 0.0
        %264 = vmatprep.subr.mxu0 0.0
        %265 = vmatpush1.msra.mxu0 0.0
        %266 = vmatprep.subr.mxu0 0.0
        %267 = vmatpush1.msra.mxu0 0.0
        %268 = vmatprep.subr.mxu0 0.0
        %269 = vmatpush1.msra.mxu0 0.0
        %270 = vmatprep.subr.mxu0 0.0
        %271 = vmatpush1.msra.mxu0 0.0
        %272 = vmatprep.subr.mxu0 0.0
        %273 = vmatpush1.msra.mxu0 0.0
        %274 = vmatprep.subr.mxu0 0.0
        %275 = vmatpush1.msra.mxu0 0.0
        %276 = vmatprep.subr.mxu0 0.0
        %277 = vmatpush1.msra.mxu0 0.0
        %278 = vmatprep.subr.mxu0 0.0
        %279 = vmatpush1.msra.mxu0 0.0
        %280 = vmatprep.subr.mxu0 0.0
        %281 = vmatpush1.msra.mxu0 0.0
        %282 = vmatprep.subr.mxu0 0.0
        %283 = vmatpush1.msra.mxu0 0.0
        %284 = vmatprep.subr.mxu0 0.0
        %285 = vmatpush1.msra.mxu0 0.0
        %286 = vmatprep.mubr.f32.mxu0 0.0
        %287 = vmatmul.mubr.f32.gmra.mrb[0].mxu0 %v213
        %v288 = vpop.f32.mrb[0].mxu0
        %v289 = vadd.f32 %v209, %v288
        %v290 = vpop.f32.mrb[0].mxu0
        %v291 = vadd.f32 %v209, %v290
        %292 = vdwg.mxu0
        %v295 = vcombine.low %v289, %v291
        %297 = vst [vmem:[%s188] sm:$0xff] %v295
        %s298 = sand.u32 %s109, 1
        %s299 = scalar_lea.sflag [#allocation3], %s298
        %s300 = sand.u32 %s109, 1
        %s301 = smul.addr %s300, 8
        %s302 = scalar_lea.vmem [#allocation2], %s301
        // Predicated region
        $region33: #{tpu_custom_call.1} parent=31 // pred_check
          %p303 = pneg %p119
        $region34: #{tpu_custom_call.1} parent=31 // pred_check_branch
          %305 = sbr.rel (%p303) target = $region36
        $region35: #{tpu_custom_call.1} parent=31 // pred_region
          %s306 = smul.u32 2, %s22
          %s308 = ssub.s32 128, 128
          %309 = vsyncadd %s299, %s308
          %s310 = smul.addr %s21, 2
          %s311 = sadd.s32 %s306, %s310
          %s312 = smul.addr %s311, 64
          %s313 = scalar_lea.hbm %s3, %s312
          %s315 = sshll.u32 %s302, 4
          %s316 = int_to_ptr.vmem [resolvable:$true] %s315
          %318 = dma.vmem_to_hbm [thread:$0]  %s316, 128, %s313, %s299
        $region36: #{tpu_custom_call.1} parent=31 // pred_fallthru
          _
      $region32: #{tpu_custom_call.1} parent=5 // pred_fallthru
        _
      %p319 = scmp.le.s32.totalorder 2, %s12
      // Predicated region
      $region37: #{tpu_custom_call.1} parent=5 // pred_check
        %p320 = pneg %p319
      $region38: #{tpu_custom_call.1} parent=5 // pred_check_branch
        %322 = sbr.rel (%p320) target = $region40
      $region39: #{tpu_custom_call.1} parent=5 // pred_region
        %s323 = ssub.s32 %s12, 2
        // Predicated region
        $region41: #{tpu_custom_call.1} parent=39 // pred_check
          %p324 = pneg %p125
        $region42: #{tpu_custom_call.1} parent=39 // pred_check_branch
          %326 = sbr.rel (%p324) target = $region44
        $region43: #{tpu_custom_call.1} parent=39 // pred_region
          %s327 = sand.u32 %s110, 1
          %s328 = scalar_lea.sflag [#allocation3], %s327
          %s329 = sand.u32 %s110, 1
          %s330 = smul.addr %s329, 8
          %s331 = scalar_lea.vmem [#allocation2], %s330
          %332 = dma.done %s328, 128
        $region44: #{tpu_custom_call.1} parent=39 // pred_fallthru
          _
      $region40: #{tpu_custom_call.1} parent=5 // pred_fallthru
        _
    $region6: #{tpu_custom_call.1} parent=1 // loop_footer
      %s16 = sadd.s32 1, %s12
    $region7: #{tpu_custom_call.1} parent=1 // loop_footer_branch
      %11 = sbr.rel target = $region3
    $region8: #{tpu_custom_call.1} parent=1 // loop_exit
      _
    %333 = vsyncpa [#allocation3], 1
    %s334 = scalar_lea.sflag [#allocation3], 1
    %335 = vsyncpa %s334, 1

</llo_original>
